<compile_context>
chip_gen: v7x
topology: tpu7x:2x2x1
jax: 0.10.0
libtpu: 0.0.40
codegen_flags: <defaults>
</compile_context>

<pallas_src>
import functools

import jax
import jax.numpy as jnp
from jax.experimental import pallas as pl
from jax.experimental.pallas import tpu as pltpu


def _round_up(n, m):
    return ((n + m - 1) // m) * m


def _cdiv(a, b):
    return -(-a // b)


def _vmem_budget_bytes():
    """Generation-aware VMEM budget (~80% of per-core capacity)."""
    try:
        cap = int(pltpu.get_tpu_info().vmem_capacity_bytes)
    except Exception:
        cap = 64 << 20  # conservative fallback (v7x per-TC capacity)
    return int(0.8 * cap)


def _bf16_act_ok():
    """bf16 VPU/EUP exists on v6e/v7x; keep f32 activations elsewhere (v5e-safe)."""
    try:
        kind = jax.devices()[0].device_kind.lower()
    except Exception:
        return False
    return any(tag in kind for tag in ("v6", "v7", "7x"))


def mlp_kernel(x_ref, w1_ref, b1_ref, w2_ref, b2_ref, o_ref, acc_ref, *, act_dtype):
    """One (batch-tile i, hidden-tile j) grid step.

    out[i] = tanh( sum_j tanh(x[i] @ W1[:, j] + b1[j]) @ W2[j, :] + b2 )
    Tiling H is exact because the first tanh is elementwise per hidden unit.
    """
    j = pl.program_id(1)

    @pl.when(j == 0)
    def _():
        acc_ref[...] = jnp.zeros_like(acc_ref)

    # Layer 1 partial: bf16 operands on the MXU, f32 accumulation.
    h = jnp.dot(x_ref[...], w1_ref[...], preferred_element_type=jnp.float32)
    # Bias-add in f32 (VPU); tanh in act_dtype (bf16 EUP on v6e/v7x, f32 on v5e).
    h = jnp.tanh((h + b1_ref[...]).astype(act_dtype))
    # Layer 2 partial: accumulate into the f32 scratch (zero-padded H columns
    # contribute exactly 0 because the matching W2 rows are zero).
    acc_ref[...] += jnp.dot(h.astype(jnp.bfloat16), w2_ref[...],
                            preferred_element_type=jnp.float32)

    @pl.when(j == pl.num_programs(1) - 1)
    def _():
        o_ref[...] = jnp.tanh(acc_ref[...] + b2_ref[...]).astype(o_ref.dtype)


def prepare_params(w1, b1, w2, b2, *, vmem_budget=None):
    """Pad / cast weights ONCE (outside the per-call path) and pick the H tile.

    w1: [dim_in, H], b1: [1, H], w2: [H, dim_out], b2: [1, dim_out].
    Returns (arrays, meta): device-ready padded bf16 weights + f32 biases.
    """
    if vmem_budget is None:
        vmem_budget = _vmem_budget_bytes()

    dim_in, H = w1.shape
    dim_out = w2.shape[1]
    b1 = jnp.reshape(b1, (1, H)).astype(jnp.float32)
    b2 = jnp.reshape(b2, (1, dim_out)).astype(jnp.float32)

    dim_out_p = _round_up(dim_out, 128)
    H_p_full = _round_up(H, 128)

    # Weight footprint if the full hidden dim stays VMEM-resident (single buffer).
    single_w = (dim_in * H_p_full + H_p_full * dim_out_p) * 2 + (H_p_full + dim_out_p) * 4
    if single_w <= vmem_budget // 3:
        TH, H_p, n_h = H_p_full, H_p_full, 1
    else:
        # Tile the hidden dim; tiles are multiples of 256 (feeds the 256-wide
        # MXU on v6e/v7x) and double-buffered by the auto-pipeline.
        def tile_bytes(th):
            return 2 * ((dim_in * th + th * dim_out_p) * 2 + th * 4) + dim_out_p * 4

        TH = 512
        while TH > 256 and tile_bytes(TH) > vmem_budget // 3:
            TH -= 256
        H_p = _round_up(H, TH)
        n_h = H_p // TH

    # Zero-pad + cast weights to bf16 MXU operands; biases stay f32.
    w1_p = jnp.pad(w1.astype(jnp.bfloat16), ((0, 0), (0, H_p - H)))
    w2_p = jnp.pad(w2.astype(jnp.bfloat16), ((0, H_p - H), (0, dim_out_p - dim_out)))
    b1_p = jnp.pad(b1, ((0, 0), (0, H_p - H)))
    b2_p = jnp.pad(b2, ((0, 0), (0, dim_out_p - dim_out)))

    meta = dict(dim_in=int(dim_in), dim_out=int(dim_out), dim_out_p=int(dim_out_p),
                H_p=int(H_p), TH=int(TH), n_h=int(n_h), vmem_budget=int(vmem_budget))
    return (w1_p, b1_p, w2_p, b2_p), meta


@functools.partial(
    jax.jit,
    static_argnames=("dim_in", "dim_out_p", "TH", "n_h", "TM", "n_b",
                     "act_bf16", "vmem_limit"))
def _mlp_call(x_p, w1_p, b1_p, w2_p, b2_p, *, dim_in, dim_out_p, TH, n_h,
              TM, n_b, act_bf16, vmem_limit):
    act_dtype = jnp.bfloat16 if act_bf16 else jnp.float32
    kernel = functools.partial(mlp_kernel, act_dtype=act_dtype)

    # Grid-invariant operands (single H tile) need only one VMEM buffer;
    # H-tiled operands keep the default double buffer for pipelining.
    def w_spec(shape, imap):
        if n_h == 1:
            return pl.BlockSpec(shape, imap, pipeline_mode=pl.Buffered(1))
        return pl.BlockSpec(shape, imap)

    return pl.pallas_call(
        kernel,
        out_shape=jax.ShapeDtypeStruct((n_b * TM, dim_out_p), jnp.bfloat16),
        grid=(n_b, n_h),
        in_specs=[
            # x: tiled over batch; feature dim left UNPADDED (block == full dim)
            # to avoid inflating the dominant HBM stream in the small-K regime.
            pl.BlockSpec((TM, dim_in), lambda i, j: (i, 0)),
            w_spec((dim_in, TH), lambda i, j: (0, j)),       # W1 column tile
            w_spec((1, TH), lambda i, j: (0, j)),            # b1 tile
            w_spec((TH, dim_out_p), lambda i, j: (j, 0)),    # W2 row tile
            pl.BlockSpec((1, dim_out_p), lambda i, j: (0, 0),
                         pipeline_mode=pl.Buffered(1)),      # b2: always invariant
        ],
        out_specs=pl.BlockSpec((TM, dim_out_p), lambda i, j: (i, 0)),
        scratch_shapes=[pltpu.VMEM((TM, dim_out_p), jnp.float32)],
        compiler_params=pltpu.CompilerParams(
            dimension_semantics=("parallel", "arbitrary"),
            vmem_limit_bytes=vmem_limit,
        ),
    )(x_p, w1_p, b1_p, w2_p, b2_p)


def mlp_pallas(x, prepared, *, tm=512):
    """x: [B, dim_in] float32; prepared = prepare_params(w1, b1, w2, b2)."""
    (w1_p, b1_p, w2_p, b2_p), meta = prepared
    B, dim_in = x.shape
    assert dim_in == meta["dim_in"]
    dim_out_p, TH, n_h = meta["dim_out_p"], meta["TH"], meta["n_h"]
    budget = meta["vmem_budget"]

    # Resident weight bytes: single-buffered when grid-invariant, else 2 tile bufs.
    if n_h == 1:
        w_bytes = (dim_in * TH + TH * dim_out_p) * 2 + (TH + dim_out_p) * 4
    else:
        w_bytes = 2 * ((dim_in * TH + TH * dim_out_p) * 2 + TH * 4) + dim_out_p * 4

    # Largest batch tile (multiple of 16 rows, bf16 sublane packing) in budget.
    per_row = (2 * dim_in * 2        # x tile, bf16, double-buffered
               + 2 * dim_out_p * 2   # out tile, bf16, double-buffered
               + dim_out_p * 4       # f32 accumulator scratch
               + 2 * TH * 4)         # f32 intermediate h (+ headroom)
    rows_fit = max((budget - w_bytes) // per_row, 16)
    tm_fit = max(16, (rows_fit // 16) * 16)
    TM0 = min(tm, tm_fit, _round_up(B, 16))
    TM0 = max(16, (TM0 // 16) * 16)

    # Balance the batch grid and keep the step count even (2 TCs on v7x).
    n_b = _cdiv(B, TM0)
    if n_b > 1 and n_b % 2 == 1:
        n_b += 1
    TM = _round_up(_cdiv(B, n_b), 16)
    B_p = n_b * TM

    # Cast to bf16 BEFORE padding so the pad copy moves half the bytes.
    x_p = jnp.pad(x.astype(jnp.bfloat16), ((0, B_p - B), (0, 0)))

    out_p = _mlp_call(x_p, w1_p, b1_p, w2_p, b2_p,
                      dim_in=dim_in, dim_out_p=dim_out_p, TH=TH, n_h=n_h,
                      TM=TM, n_b=n_b, act_bf16=_bf16_act_ok(),
                      vmem_limit=budget)
    # Strip batch/feature padding; return in the module's dtype (bf16 matmul
    # operands + bf16 output -> ~1e-2-level error vs the f32 reference).
    return out_p[:B, :meta["dim_out"]].astype(x.dtype)


def init_linear_params(key, fan_in, fan_out):
    """torch.nn.Linear-style init: U(-1/sqrt(fan_in), 1/sqrt(fan_in)).
    Weight returned already transposed to [fan_in, fan_out]; bias is [1, fan_out]."""
    k_w, k_b = jax.random.split(key)
    bound = 1.0 / jnp.sqrt(jnp.float32(fan_in))
    w = jax.random.uniform(k_w, (fan_in, fan_out), jnp.float32, -bound, bound)
    b = jax.random.uniform(k_b, (1, fan_out), jnp.float32, -bound, bound)
    return w, b


def mlp_ref(x, w1, b1, w2, b2):
    return jnp.tanh(jnp.tanh(x @ w1 + b1) @ w2 + b2)


if __name__ == "__main__":
    # Small shapes consistent with the module's forward: x [B, dim_in].
    B, dim_in, H, dim_out = 8, 32, 64, 16

    key = jax.random.PRNGKey(0)
    k_x, k_x2, k_l1, k_l2 = jax.random.split(key, 4)

    x = jax.random.normal(k_x, (B, dim_in), jnp.float32)
    w1, b1 = init_linear_params(k_l1, dim_in, H)
    w2, b2 = init_linear_params(k_l2, H, dim_out)

    # Pad / cast weights once; reuse across calls (serving-style).
    prepared = prepare_params(w1, b1, w2, b2)

    # Single-tile case (grid of (1, 1)).
    out = jax.block_until_ready(mlp_pallas(x, prepared))
    ref = mlp_ref(x, w1, b1, w2, b2)
    assert out.shape == (B, dim_out)
    # bf16 matmul operands + bf16 activations/output -> loosened tolerance.
    assert jnp.allclose(out, ref, atol=4e-2, rtol=4e-2)

    # Multi-tile batch grid + pipelining (B not a tile multiple, even grid).
    B2 = 600
    x2 = jax.random.normal(k_x2, (B2, dim_in), jnp.float32)
    out2 = jax.block_until_ready(mlp_pallas(x2, prepared))
    ref2 = mlp_ref(x2, w1, b1, w2, b2)
    assert out2.shape == (B2, dim_out)
    assert jnp.allclose(out2, ref2, atol=4e-2, rtol=4e-2)

    print("KERNEL_OK")
</pallas_src>

<mosaic_0001>
module attributes {stable_mosaic.version = 11 : i64} {
  func.func @mlp_kernel(%arg0: i32, %arg1: i32, %arg2: memref<16x32xbf16, #tpu.memory_space<vmem>>, %arg3: memref<32x128xbf16, #tpu.memory_space<vmem>>, %arg4: memref<1x128xf32, #tpu.memory_space<vmem>>, %arg5: memref<128x128xbf16, #tpu.memory_space<vmem>>, %arg6: memref<1x128xf32, #tpu.memory_space<vmem>>, %arg7: memref<16x128xbf16, #tpu.memory_space<vmem>>, %arg8: memref<16x128xf32, #tpu.memory_space<vmem>>) attributes {dimension_semantics = [#tpu.dimension_semantics<parallel>, #tpu.dimension_semantics<arbitrary>], iteration_bounds = array<i64: 1, 1>, scalar_prefetch = 0 : i64, scratch_operands = 1 : i64, tpu.core_type = #tpu.core_type<tc>, window_params = [{transform_indices = @transform_0, window_bounds = array<i64: 16, 32>}, {pipeline_mode = #tpu.pipeline_mode<synchronous>, transform_indices = @transform_1, window_bounds = array<i64: 32, 128>}, {pipeline_mode = #tpu.pipeline_mode<synchronous>, transform_indices = @transform_2, window_bounds = array<i64: 1, 128>}, {pipeline_mode = #tpu.pipeline_mode<synchronous>, transform_indices = @transform_3, window_bounds = array<i64: 128, 128>}, {pipeline_mode = #tpu.pipeline_mode<synchronous>, transform_indices = @transform_4, window_bounds = array<i64: 1, 128>}, {transform_indices = @transform_5, window_bounds = array<i64: 16, 128>}]} {
    %c0_i32 = arith.constant 0 : i32
    %0 = arith.cmpi eq, %arg1, %c0_i32 : i32
    %1 = arith.extui %0 : i1 to i32
    %c0_i32_0 = arith.constant 0 : i32
    %2 = arith.cmpi ne, %1, %c0_i32_0 : i32
    scf.if %2 {
      %cst_15 = arith.constant 0.000000e+00 : f32
      %19 = vector.broadcast %cst_15 : f32 to vector<16x128xf32>
      %c0_16 = arith.constant 0 : index
      %c0_17 = arith.constant 0 : index
      %20 = vector.load %arg8[%c0_16, %c0_17] : memref<16x128xf32, #tpu.memory_space<vmem>>, vector<16x128xf32>
      tpu.vector_store %arg8[%c0_16, %c0_17], %19 {strides = array<i32>} : memref<16x128xf32, #tpu.memory_space<vmem>>, vector<16x128xf32>,
    } else {
    }
    %c0 = arith.constant 0 : index
    %c0_1 = arith.constant 0 : index
    %3 = vector.load %arg2[%c0, %c0_1] : memref<16x32xbf16, #tpu.memory_space<vmem>>, vector<16x32xbf16>
    %c0_2 = arith.constant 0 : index
    %c0_3 = arith.constant 0 : index
    %4 = vector.load %arg3[%c0_2, %c0_3] : memref<32x128xbf16, #tpu.memory_space<vmem>>, vector<32x128xbf16>
    %cst = arith.constant dense<0.000000e+00> : vector<16x128xf32>
    %5 = tpu.matmul %3, %4, %cst {dimension_numbers = #tpu.dot_dimension_numbers<[1], [0], [0], [1], [0, 0, 1, 1], [], []>} : vector<16x32xbf16>, vector<32x128xbf16>, vector<16x128xf32> -> vector<16x128xf32>
    %c0_4 = arith.constant 0 : index
    %c0_5 = arith.constant 0 : index
    %6 = vector.load %arg4[%c0_4, %c0_5] : memref<1x128xf32, #tpu.memory_space<vmem>>, vector<1x128xf32>
    %7 = vector.broadcast %6 : vector<1x128xf32> to vector<16x128xf32>
    %8 = arith.addf %5, %7 : vector<16x128xf32>
    %9 = math.tanh %8 : vector<16x128xf32>
    %c0_6 = arith.constant 0 : index
    %c0_7 = arith.constant 0 : index
    %10 = vector.load %arg8[%c0_6, %c0_7] : memref<16x128xf32, #tpu.memory_space<vmem>>, vector<16x128xf32>
    %11 = arith.truncf %9 : vector<16x128xf32> to vector<16x128xbf16>
    %c0_8 = arith.constant 0 : index
    %c0_9 = arith.constant 0 : index
    %12 = vector.load %arg5[%c0_8, %c0_9] : memref<128x128xbf16, #tpu.memory_space<vmem>>, vector<128x128xbf16>
    %cst_10 = arith.constant dense<0.000000e+00> : vector<16x128xf32>
    %13 = tpu.matmul %11, %12, %cst_10 {dimension_numbers = #tpu.dot_dimension_numbers<[1], [0], [0], [1], [0, 0, 1, 1], [], []>} : vector<16x128xbf16>, vector<128x128xbf16>, vector<16x128xf32> -> vector<16x128xf32>
    %14 = arith.addf %10, %13 : vector<16x128xf32>
    %c0_11 = arith.constant 0 : index
    %c0_12 = arith.constant 0 : index
    %15 = vector.load %arg8[%c0_11, %c0_12] : memref<16x128xf32, #tpu.memory_space<vmem>>, vector<16x128xf32>
    tpu.vector_store %arg8[%c0_11, %c0_12], %14 {strides = array<i32>} : memref<16x128xf32, #tpu.memory_space<vmem>>, vector<16x128xf32>,
    %c0_i32_13 = arith.constant 0 : i32
    %16 = arith.cmpi eq, %arg1, %c0_i32_13 : i32
    %17 = arith.extui %16 : i1 to i32
    %c0_i32_14 = arith.constant 0 : i32
    %18 = arith.cmpi ne, %17, %c0_i32_14 : i32
    scf.if %18 {
      %c0_15 = arith.constant 0 : index
      %c0_16 = arith.constant 0 : index
      %19 = vector.load %arg8[%c0_15, %c0_16] : memref<16x128xf32, #tpu.memory_space<vmem>>, vector<16x128xf32>
      %c0_17 = arith.constant 0 : index
      %c0_18 = arith.constant 0 : index
      %20 = vector.load %arg6[%c0_17, %c0_18] : memref<1x128xf32, #tpu.memory_space<vmem>>, vector<1x128xf32>
      %21 = vector.broadcast %20 : vector<1x128xf32> to vector<16x128xf32>
      %22 = arith.addf %19, %21 : vector<16x128xf32>
      %23 = math.tanh %22 : vector<16x128xf32>
      %24 = arith.truncf %23 : vector<16x128xf32> to vector<16x128xbf16>
      %c0_19 = arith.constant 0 : index
      %c0_20 = arith.constant 0 : index
      %25 = vector.load %arg7[%c0_19, %c0_20] : memref<16x128xbf16, #tpu.memory_space<vmem>>, vector<16x128xbf16>
      tpu.vector_store %arg7[%c0_19, %c0_20], %24 {strides = array<i32>} : memref<16x128xbf16, #tpu.memory_space<vmem>>, vector<16x128xbf16>,
    } else {
    }
    return
  }
  func.func @transform_0(%arg0: i32, %arg1: i32) -> (i32, i32) {
    %c0_i32 = arith.constant 0 : i32
    %c0_i32_0 = arith.constant 0 : i32
    return %arg0, %c0_i32 : i32, i32
  }
  func.func @transform_1(%arg0: i32, %arg1: i32) -> (i32, i32) {
    %c0_i32 = arith.constant 0 : i32
    %c0_i32_0 = arith.constant 0 : i32
    return %c0_i32, %arg1 : i32, i32
  }
  func.func @transform_2(%arg0: i32, %arg1: i32) -> (i32, i32) {
    %c0_i32 = arith.constant 0 : i32
    %c0_i32_0 = arith.constant 0 : i32
    return %c0_i32, %arg1 : i32, i32
  }
  func.func @transform_3(%arg0: i32, %arg1: i32) -> (i32, i32) {
    %c0_i32 = arith.constant 0 : i32
    %c0_i32_0 = arith.constant 0 : i32
    return %arg1, %c0_i32 : i32, i32
  }
  func.func @transform_4(%arg0: i32, %arg1: i32) -> (i32, i32) {
    %c0_i32 = arith.constant 0 : i32
    %c0_i32_0 = arith.constant 0 : i32
    %c0_i32_1 = arith.constant 0 : i32
    return %c0_i32, %c0_i32_0 : i32, i32
  }
  func.func @transform_5(%arg0: i32, %arg1: i32) -> (i32, i32) {
    %c0_i32 = arith.constant 0 : i32
    %c0_i32_0 = arith.constant 0 : i32
    return %arg0, %c0_i32 : i32, i32
  }
}

</mosaic_0001>

<llo_original>
// kernel: _mlp_call.1
$region0: #{_mlp_call.1}
  #allocation0 [shape = 'u32[]', space=smem, size = 0x4, offset = 0x4, fixed_abs, tag = 'smem constant byte address 0x4 - core index']
  #allocation1 [shape = 'u32[144,128]{1,0:T(1,128)}', space=vmem, size = 0x12000, scoped, tag = 'internal scratch']
  #allocation2 [shape = 'f32[16,128]{1,0:T(8,128)}', space=vmem, size = 0x2000, scoped, tag = 'scratch operand']
  %s0 = inlined_call_operand.hbm [shape: bf16[16,32], index: 0, kind: input, shape index: {}]
  %s1 = inlined_call_operand.hbm [shape: bf16[32,128], index: 1, kind: input, shape index: {}]
  %s2 = inlined_call_operand.vmem [shape: f32[1,128], index: 2, kind: input, shape index: {}]
  %s3 = inlined_call_operand.hbm [shape: bf16[128,128], index: 3, kind: input, shape index: {}]
  %s4 = inlined_call_operand.vmem [shape: f32[1,128], index: 4, kind: input, shape index: {}]
  %s5 = inlined_call_operand.hbm [shape: bf16[16,128], index: 5, kind: output, shape index: {}]
  %s6 = sld [smem:[#allocation0]]
  $region50: #{_mlp_call.1} parent=0
    _
  %s8 = ssub.s32 1, %s6
  %s9 = scalar_select 0, %s8, %s6
  $region1: #{_mlp_call.1} parent=0
    #allocation3 [shape = 'u8[4096]{0}', space=vmem, size = 0x1000, scoped, tag = 'input window, operand 0, single buffered']
    #allocation4 [shape = 's32[1]{0}', space=sflag, size = 0x4, scoped, tag = 'scoped memory for _mlp_call.1']
    #allocation5 [shape = 's32[1]{0}', space=sflag, size = 0x4, scoped, tag = 'scoped memory for _mlp_call.1']
    #allocation6 [shape = 'u8[8192]{0}', space=vmem, size = 0x2000, scoped, tag = 'input window, operand 1, single buffered']
    #allocation7 [shape = 's32[1]{0}', space=sflag, size = 0x4, scoped, tag = 'scoped memory for _mlp_call.1']
    #allocation8 [shape = 'u8[32768]{0}', space=vmem, size = 0x8000, scoped, tag = 'input window, operand 3, single buffered']
    #allocation9 [shape = 'u8[4096]{0}', space=vmem, size = 0x1000, scoped, tag = 'output window, operand 0, single buffered']
    %10 = vsyncpa [#allocation4], 0
    %11 = vsyncpa [#allocation7], 0
    %12 = vsyncpa [#allocation5], 0
    // Predicated region
    $region2: #{_mlp_call.1} parent=1 // pred_check
      _
    $region3: #{_mlp_call.1} parent=1 // pred_check_branch
      %14 = sbr.rel (0) target = $region5
    $region4: #{_mlp_call.1} parent=1 // pred_region
      %s16 = ssub.s32 128, 128
      %17 = vsyncadd [#allocation4], %s16
      %s18 = sshll.u32 [#allocation3], 4
      %s19 = int_to_ptr.vmem [resolvable:$true] %s18
      %24 = dma.hbm_to_vmem [thread:$0]  %s0, 128, %s19, [#allocation4], 64, 64, 4
    $region5: #{_mlp_call.1} parent=1 // pred_fallthru
      _
    // Predicated region
    $region6: #{_mlp_call.1} parent=1 // pred_check
      _
    $region7: #{_mlp_call.1} parent=1 // pred_check_branch
      %26 = sbr.rel (0) target = $region9
    $region8: #{_mlp_call.1} parent=1 // pred_region
      %s28 = ssub.s32 256, 256
      %29 = vsyncadd [#allocation7], %s28
      %s30 = sshll.u32 [#allocation6], 4
      %s31 = int_to_ptr.vmem [resolvable:$true] %s30
      %36 = dma.hbm_to_vmem [thread:$0]  %s1, 256, %s31, [#allocation7], 64, 64, 4
    $region9: #{_mlp_call.1} parent=1 // pred_fallthru
      _
    // Predicated region
    $region10: #{_mlp_call.1} parent=1 // pred_check
      _
    $region11: #{_mlp_call.1} parent=1 // pred_check_branch
      %38 = sbr.rel (0) target = $region13
    $region12: #{_mlp_call.1} parent=1 // pred_region
      _
    $region13: #{_mlp_call.1} parent=1 // pred_fallthru
      _
    // Predicated region
    $region14: #{_mlp_call.1} parent=1 // pred_check
      _
    $region15: #{_mlp_call.1} parent=1 // pred_check_branch
      %40 = sbr.rel (0) target = $region17
    $region16: #{_mlp_call.1} parent=1 // pred_region
      %s42 = ssub.s32 1024, 1024
      %43 = vsyncadd [#allocation7], %s42
      %s44 = sshll.u32 [#allocation8], 4
      %s45 = int_to_ptr.vmem [resolvable:$true] %s44
      %50 = dma.hbm_to_vmem [thread:$0]  %s3, 1024, %s45, [#allocation7], 64, 64, 4
    $region17: #{_mlp_call.1} parent=1 // pred_fallthru
      _
    // Predicated region
    $region18: #{_mlp_call.1} parent=1 // pred_check
      _
    $region19: #{_mlp_call.1} parent=1 // pred_check_branch
      %52 = sbr.rel (0) target = $region21
    $region20: #{_mlp_call.1} parent=1 // pred_region
      _
    $region21: #{_mlp_call.1} parent=1 // pred_fallthru
      _
    // Predicated region
    $region22: #{_mlp_call.1} parent=1 // pred_check
      _
    $region23: #{_mlp_call.1} parent=1 // pred_check_branch
      %54 = sbr.rel (0) target = $region25
    $region24: #{_mlp_call.1} parent=1 // pred_region
      %55 = dma.done [#allocation4], 128
    $region25: #{_mlp_call.1} parent=1 // pred_fallthru
      _
    // Predicated region
    $region26: #{_mlp_call.1} parent=1 // pred_check
      _
    $region27: #{_mlp_call.1} parent=1 // pred_check_branch
      %57 = sbr.rel (0) target = $region29
    $region28: #{_mlp_call.1} parent=1 // pred_region
      %58 = dma.done [#allocation7], 256
    $region29: #{_mlp_call.1} parent=1 // pred_fallthru
      _
    // Predicated region
    $region30: #{_mlp_call.1} parent=1 // pred_check
      _
    $region31: #{_mlp_call.1} parent=1 // pred_check_branch
      %60 = sbr.rel (0) target = $region33
    $region32: #{_mlp_call.1} parent=1 // pred_region
      %61 = dma.done [#allocation7], 1024
    $region33: #{_mlp_call.1} parent=1 // pred_fallthru
      _
    %p63 = scmp.eq.s32.totalorder 0, 0
    // Predicated region
    $region34: #{_mlp_call.1} parent=1 // pred_check
      %p64 = pneg %p63
    $region35: #{_mlp_call.1} parent=1 // pred_check_branch
      %66 = sbr.rel (%p64) target = $region37
    $region36: #{_mlp_call.1} parent=1 // pred_region
      %67 = vst [vmem:[#allocation2] sm:$0xff] 0.0
      %68 = vst [vmem:[#allocation2 + $0x8] sm:$0xff] 0.0
    $region37: #{_mlp_call.1} parent=1 // pred_fallthru
      _
    %v69 = vld [vmem:[#allocation3] sm:$0xf]
    %v70 = vld [vmem:[#allocation3 + $0x4] sm:$0xf]
    %v71 = vld [vmem:[#allocation6] sm:$0xf]
    %v72 = vld [vmem:[#allocation6 + $0x4] sm:$0xf]
    %v73 = vld [vmem:[#allocation6 + $0x8] sm:$0xf]
    %v74 = vld [vmem:[#allocation6 + $0xc] sm:$0xf]
    %v75 = vld [vmem:[%s2] sm:$0x1]
    %v77 = vlaneseq
    %v78 = vshrl.u32 %v77, 7
    %v79 = vsub.s32 0, %v78
    %v80 = vrot.slane %v75, %v79
    %v84 = vunpack.c.l.b16 %v69
    %v85 = vunpack.c.l.b16 %v70
    %v86 = vpack.c.b16 %v85, %v84
    %v91 = vunpack.c.l.b16 %v71
    %v92 = vunpack.c.l.b16 %v72
    %v93 = vunpack.c.l.b16 %v73
    %v94 = vunpack.c.l.b16 %v74
    %v95 = vpack.c.b16 %v92, %v91
    %v96 = vpack.c.b16 %v94, %v93
    %vm99 = vcmask 261120
    %v101 = vsel %vm99, %v86, 0
    %103 = vmatprep.subr.bf16.mxu0 0
    %104 = vmatpush1.bf16.msra.mxu0 %v95
    %105 = vmatprep.subr.bf16.mxu0 0
    %106 = vmatpush1.bf16.msra.mxu0 %v96
    %107 = vmatprep.subr.bf16.mxu0 0
    %108 = vmatpush1.bf16.msra.mxu0 0
    %109 = vmatprep.subr.bf16.mxu0 0
    %110 = vmatpush1.bf16.msra.mxu0 0
    %111 = vmatprep.subr.bf16.mxu0 0
    %112 = vmatpush1.bf16.msra.mxu0 0
    %113 = vmatprep.subr.bf16.mxu0 0
    %114 = vmatpush1.bf16.msra.mxu0 0
    %115 = vmatprep.subr.bf16.mxu0 0
    %116 = vmatpush1.bf16.msra.mxu0 0
    %117 = vmatprep.subr.bf16.mxu0 0
    %118 = vmatpush1.bf16.msra.mxu0 0
    %119 = vmatprep.subr.bf16.mxu0 0
    %120 = vmatpush1.bf16.msra.mxu0 0
    %121 = vmatprep.subr.bf16.mxu0 0
    %122 = vmatpush1.bf16.msra.mxu0 0
    %123 = vmatprep.subr.bf16.mxu0 0
    %124 = vmatpush1.bf16.msra.mxu0 0
    %125 = vmatprep.subr.bf16.mxu0 0
    %126 = vmatpush1.bf16.msra.mxu0 0
    %127 = vmatprep.subr.bf16.mxu0 0
    %128 = vmatpush1.bf16.msra.mxu0 0
    %129 = vmatprep.subr.bf16.mxu0 0
    %130 = vmatpush1.bf16.msra.mxu0 0
    %131 = vmatprep.subr.bf16.mxu0 0
    %132 = vmatpush1.bf16.msra.mxu0 0
    %133 = vmatprep.subr.bf16.mxu0 0
    %134 = vmatpush1.bf16.msra.mxu0 0
    %135 = vmatprep.mubr.bf16.mxu0 0
    %136 = vmatmul.mubr.bf16.gmra.mrb[0].mxu0 %v101
    %v137 = vpop.f32.mrb[0].mxu0
    %v138 = vadd.f32 %v80, %v137
    %v139 = vpop.f32.mrb[0].mxu0
    %v140 = vpop.f32.mrb[0].mxu0
    %v141 = vadd.f32 %v80, %v140
    %v142 = vpop.f32.mrb[0].mxu0
    %143 = vdwg.mxu0
    %v144 = vtanh.pop %v138
    %v145 = vtanh.pop %v141
    %v146 = vld [vmem:[#allocation2] sm:$0xff]
    %v147 = vld [vmem:[#allocation2 + $0x8] sm:$0xff]
    %v148 = vpack.c.bf16 %v145, %v144
    %v149 = vld [vmem:[#allocation8] sm:$0xf]
    %v150 = vld [vmem:[#allocation8 + $0x4] sm:$0xf]
    %v151 = vld [vmem:[#allocation8 + $0x8] sm:$0xf]
    %v152 = vld [vmem:[#allocation8 + $0xc] sm:$0xf]
    %v153 = vld [vmem:[#allocation8 + $0x10] sm:$0xf]
    %v154 = vld [vmem:[#allocation8 + $0x14] sm:$0xf]
    %v155 = vld [vmem:[#allocation8 + $0x18] sm:$0xf]
    %v156 = vld [vmem:[#allocation8 + $0x1c] sm:$0xf]
    %v157 = vld [vmem:[#allocation8 + $0x20] sm:$0xf]
    %v158 = vld [vmem:[#allocation8 + $0x24] sm:$0xf]
    %v159 = vld [vmem:[#allocation8 + $0x28] sm:$0xf]
    %v160 = vld [vmem:[#allocation8 + $0x2c] sm:$0xf]
    %v161 = vld [vmem:[#allocation8 + $0x30] sm:$0xf]
    %v162 = vld [vmem:[#allocation8 + $0x34] sm:$0xf]
    %v163 = vld [vmem:[#allocation8 + $0x38] sm:$0xf]
    %v164 = vld [vmem:[#allocation8 + $0x3c] sm:$0xf]
    %v181 = vunpack.c.l.b16 %v149
    %v182 = vunpack.c.l.b16 %v150
    %v183 = vunpack.c.l.b16 %v151
    %v184 = vunpack.c.l.b16 %v152
    %v185 = vunpack.c.l.b16 %v153
    %v186 = vunpack.c.l.b16 %v154
    %v187 = vunpack.c.l.b16 %v155
    %v188 = vunpack.c.l.b16 %v156
    %v189 = vunpack.c.l.b16 %v157
    %v190 = vunpack.c.l.b16 %v158
    %v191 = vunpack.c.l.b16 %v159
    %v192 = vunpack.c.l.b16 %v160
    %v193 = vunpack.c.l.b16 %v161
    %v194 = vunpack.c.l.b16 %v162
    %v195 = vunpack.c.l.b16 %v163
    %v196 = vunpack.c.l.b16 %v164
    %v197 = vpack.c.b16 %v182, %v181
    %v198 = vpack.c.b16 %v184, %v183
    %v199 = vpack.c.b16 %v186, %v185
    %v200 = vpack.c.b16 %v188, %v187
    %v201 = vpack.c.b16 %v190, %v189
    %v202 = vpack.c.b16 %v192, %v191
    %v203 = vpack.c.b16 %v194, %v193
    %v204 = vpack.c.b16 %v196, %v195
    %213 = vmatprep.subr.bf16.mxu0 0
    %214 = vmatpush1.bf16.msra.mxu0 %v197
    %215 = vmatprep.subr.bf16.mxu0 0
    %216 = vmatpush1.bf16.msra.mxu0 %v198
    %217 = vmatprep.subr.bf16.mxu0 0
    %218 = vmatpush1.bf16.msra.mxu0 %v199
    %219 = vmatprep.subr.bf16.mxu0 0
    %220 = vmatpush1.bf16.msra.mxu0 %v200
    %221 = vmatprep.subr.bf16.mxu0 0
    %222 = vmatpush1.bf16.msra.mxu0 %v201
    %223 = vmatprep.subr.bf16.mxu0 0
    %224 = vmatpush1.bf16.msra.mxu0 %v202
    %225 = vmatprep.subr.bf16.mxu0 0
    %226 = vmatpush1.bf16.msra.mxu0 %v203
    %227 = vmatprep.subr.bf16.mxu0 0
    %228 = vmatpush1.bf16.msra.mxu0 %v204
    %229 = vmatprep.subr.bf16.mxu0 0
    %230 = vmatpush1.bf16.msra.mxu0 0
    %231 = vmatprep.subr.bf16.mxu0 0
    %232 = vmatpush1.bf16.msra.mxu0 0
    %233 = vmatprep.subr.bf16.mxu0 0
    %234 = vmatpush1.bf16.msra.mxu0 0
    %235 = vmatprep.subr.bf16.mxu0 0
    %236 = vmatpush1.bf16.msra.mxu0 0
    %237 = vmatprep.subr.bf16.mxu0 0
    %238 = vmatpush1.bf16.msra.mxu0 0
    %239 = vmatprep.subr.bf16.mxu0 0
    %240 = vmatpush1.bf16.msra.mxu0 0
    %241 = vmatprep.subr.bf16.mxu0 0
    %242 = vmatpush1.bf16.msra.mxu0 0
    %243 = vmatprep.subr.bf16.mxu0 0
    %244 = vmatpush1.bf16.msra.mxu0 0
    %245 = vmatprep.mubr.bf16.mxu0 0
    %246 = vmatmul.mubr.bf16.gmra.mrb[0].mxu0 %v148
    %v247 = vpop.f32.mrb[0].mxu0
    %v248 = vadd.f32 0.0, %v247
    %v249 = vpop.f32.mrb[0].mxu0
    %v250 = vpop.f32.mrb[0].mxu0
    %v251 = vadd.f32 0.0, %v250
    %v252 = vpop.f32.mrb[0].mxu0
    %253 = vdwg.mxu0
    %v254 = vadd.f32 %v146, %v248
    %v255 = vadd.f32 %v147, %v251
    %256 = vst [vmem:[#allocation2] sm:$0xff] %v254
    %257 = vst [vmem:[#allocation2 + $0x8] sm:$0xff] %v255
    // Predicated region
    $region38: #{_mlp_call.1} parent=1 // pred_check
      %p258 = pneg %p63
    $region39: #{_mlp_call.1} parent=1 // pred_check_branch
      %260 = sbr.rel (%p258) target = $region41
    $region40: #{_mlp_call.1} parent=1 // pred_region
      %v261 = vld [vmem:[#allocation2] sm:$0xff]
      %v262 = vld [vmem:[#allocation2 + $0x8] sm:$0xff]
      %v263 = vld [vmem:[%s4] sm:$0x1]
      %v265 = vlaneseq
      %v266 = vshrl.u32 %v265, 7
      %v267 = vsub.s32 0, %v266
      %v268 = vrot.slane %v263, %v267
      %v270 = vadd.f32 %v261, %v268
      %v271 = vadd.f32 %v262, %v268
      %v272 = vtanh.pop %v270
      %v273 = vtanh.pop %v271
      %v274 = vpack.c.bf16 %v273, %v272
      %v276 = vunpack.c.l.b16 %v274
      %v277 = vunpack.c.h.b16 %v274
      %v278 = vpack.c.b16 %v276, %v276
      %v279 = vpack.c.b16 %v277, %v277
      %282 = vst [vmem:[#allocation9] sm:$0xf] %v278
      %283 = vst [vmem:[#allocation9 + $0x4] sm:$0xf] %v279
    $region41: #{_mlp_call.1} parent=1 // pred_fallthru
      _
    // Predicated region
    $region42: #{_mlp_call.1} parent=1 // pred_check
      _
    $region43: #{_mlp_call.1} parent=1 // pred_check_branch
      %285 = sbr.rel (0) target = $region45
    $region44: #{_mlp_call.1} parent=1 // pred_region
      %s287 = ssub.s32 128, 128
      %288 = vsyncadd [#allocation5], %s287
      %s289 = sshll.u32 [#allocation9], 4
      %s290 = int_to_ptr.vmem [resolvable:$true] %s289
      %295 = dma.vmem_to_hbm [thread:$0]  %s290, 128, %s5, [#allocation5], 64, 64, 4
    $region45: #{_mlp_call.1} parent=1 // pred_fallthru
      _
    // Predicated region
    $region46: #{_mlp_call.1} parent=1 // pred_check
      _
    $region47: #{_mlp_call.1} parent=1 // pred_check_branch
      %297 = sbr.rel (0) target = $region49
    $region48: #{_mlp_call.1} parent=1 // pred_region
      %298 = dma.done [#allocation5], 128
    $region49: #{_mlp_call.1} parent=1 // pred_fallthru
      _
    %299 = vsyncpa [#allocation4], 1
    %300 = vsyncpa [#allocation7], 1
    %301 = vsyncpa [#allocation5], 1

</llo_original>
